<compile_context>
chip_gen: v7x
topology: tpu7x:2x2x1
jax: 0.10.0
libtpu: 0.0.40
codegen_flags: <defaults>
</compile_context>

<pallas_src>
import functools

import jax
import jax.numpy as jnp
from jax.experimental import pallas as pl
from jax.experimental.pallas import tpu as pltpu


def _round_up(n, m):
    return ((n + m - 1) // m) * m


def _vmem_limit_bytes():
    """Generation-aware scoped-VMEM limit: ~100 MiB on v5e/v6e (128 MiB physical),
    ~50 MiB on v7x (64 MiB physical), with a conservative fallback."""
    try:
        cap = pltpu.get_tpu_info().vmem_capacity_bytes
        return max(32 * 1024 * 1024, min(int(cap * 0.78), 100 * 1024 * 1024))
    except Exception:
        return 32 * 1024 * 1024


def _exp_dtype():
    """bf16 exp on v6e/v7x (bf16-capable EUP, ~2x throughput); f32 elsewhere (v5e)."""
    try:
        kind = jax.devices()[0].device_kind.lower()
    except Exception:
        kind = ""
    if "v6" in kind or "v7" in kind:
        return jnp.bfloat16
    return jnp.float32


# ---------------------------------------------------------------------------
# Phase 1: feature transform + per-head attention logits (MXU / overhead-bound).
# ---------------------------------------------------------------------------
def _feat_kernel(x_ref, w_ref, ones_ref, att_ref, h_ref, alpha_ref):
    xb = x_ref[...]                                                        # [TM, Fin] bf16
    h32 = jnp.dot(xb, w_ref[...], preferred_element_type=jnp.float32)     # [TM, H*(C+1)]
    h32 = h32 + ones_ref[...]            # sets the per-head "ones" column (denom fold)
    hb = h32.astype(jnp.bfloat16)
    # Block-diagonal [H*(C+1), 2H] projection: cols 0:H -> src logits, H:2H -> dst logits.
    alpha = jnp.dot(hb, att_ref[...], preferred_element_type=jnp.float32)  # [TM, 2H]
    h_ref[...] = hb
    alpha_ref[...] = alpha


# ---------------------------------------------------------------------------
# Phase 2: online-softmax attention + aggregation, tiled over (dst rows, src blocks).
# ---------------------------------------------------------------------------
def _attn_kernel(adst_ref, asrcT_ref, h_ref, adj_ref, bias_ref, out_ref,
                 m_sc, acc_sc, *, heads, out_ch, concat, apply_elu,
                 exp_dtype, negative_slope=0.2):
    j = pl.program_id(1)
    nj = pl.num_programs(1)
    cext = out_ch + 1
    neg_big = jnp.float32(-1e30)

    @pl.when(j == 0)
    def _():
        m_sc[...] = jnp.full(m_sc.shape, neg_big, m_sc.dtype)
        acc_sc[...] = jnp.zeros(acc_sc.shape, acc_sc.dtype)

    adst = adst_ref[...]                          # [TI, H]        f32
    asrcT = asrcT_ref[...]                        # [H, TJ]        f32
    is_edge = adj_ref[...] != 0                   # [TI, TJ]       bool (int8 mask in)
    h_ext = h_ref[...]                            # [TJ, H*(C+1)]  bf16 (streamed block)

    for hd in range(heads):
        # e[i, j] = leaky_relu(alpha_dst[i] + alpha_src[j]); dense-mask non-edges.
        e = adst[:, hd:hd + 1] + asrcT[hd:hd + 1, :]                   # [TI, TJ]
        e = jnp.where(e >= 0.0, e, negative_slope * e)
        e = jnp.where(is_edge, e, neg_big)

        m_old = m_sc[hd, :, :]                                         # [TI, 1]
        m_blk = jnp.max(e, axis=1, keepdims=True)
        m_new = jnp.maximum(m_old, m_blk)
        scale = jnp.exp(m_old - m_new)                                 # [TI, 1] f32
        p = jnp.exp((e - m_new).astype(exp_dtype))                     # [TI, TJ]

        # MXU fold: last column of h_ext per head is 1.0, so p @ hv_ext returns the
        # numerator in cols 0:C and the block row-sum (denominator piece) in col C.
        hv = h_ext[:, hd * cext:(hd + 1) * cext]                       # [TJ, C+1] bf16
        contrib = jnp.dot(p.astype(jnp.bfloat16), hv,
                          preferred_element_type=jnp.float32)          # [TI, C+1] f32

        acc_sc[hd, :, :] = scale * acc_sc[hd, :, :] + contrib
        m_sc[hd, :, :] = m_new

    @pl.when(j == nj - 1)
    def _():
        outs = []
        for hd in range(heads):
            blk = acc_sc[hd, :, :]                                     # [TI, C+1]
            out_h = blk[:, :out_ch] * pl.reciprocal(blk[:, out_ch:], approx=True)
            outs.append(out_h)
        if concat:
            o = jnp.concatenate(outs, axis=1)                          # [TI, H*C]
        else:
            o = outs[0]
            for t in outs[1:]:
                o = o + t
            o = o * jnp.float32(1.0 / heads)
        o = o + bias_ref[...]
        if apply_elu:
            # TODO(synk): exp(x)-1 instead of expm1; negligible for this use.
            o = jnp.where(o > 0.0, o, jnp.exp(jnp.minimum(o, 0.0)) - 1.0)
        out_ref[...] = o.astype(out_ref.dtype)                         # one store / row tile


# ---------------------------------------------------------------------------
# One GATConv layer (dense-adjacency equivalent) = two pallas_calls.
# ---------------------------------------------------------------------------
def gat_conv(x, adj_i8, params, *, heads, out_ch, concat, apply_elu, tile, out_dtype):
    w, att_src, att_dst, bias = params
    n_pad, fin = x.shape
    cext = out_ch + 1
    hc_ext = heads * cext
    out_dim = heads * out_ch if concat else out_ch

    # ---- tiny XLA glue: extended (ones-column) weight & attention-projection layouts ----
    w_ext = jnp.zeros((fin, hc_ext), jnp.float32)
    att_cat = jnp.zeros((hc_ext, 2 * heads), jnp.float32)
    ones_row = jnp.zeros((1, hc_ext), jnp.float32)
    for hd in range(heads):
        c0 = hd * cext
        w_ext = w_ext.at[:, c0:c0 + out_ch].set(w[:, hd * out_ch:(hd + 1) * out_ch])
        ones_row = ones_row.at[0, c0 + out_ch].set(1.0)
        att_cat = att_cat.at[c0:c0 + out_ch, hd].set(att_src[hd])
        att_cat = att_cat.at[c0:c0 + out_ch, heads + hd].set(att_dst[hd])
    w_ext = w_ext.astype(jnp.bfloat16)
    att_cat = att_cat.astype(jnp.bfloat16)
    bias2 = bias.reshape(1, out_dim).astype(jnp.float32)

    x_bf = x if x.dtype == jnp.bfloat16 else x.astype(jnp.bfloat16)  # pre-cast once

    vmem_limit = _vmem_limit_bytes()

    # ---- Phase 1: h_ext = x @ W_ext + ones, alpha = h_ext @ att_cat_ext ----
    if n_pad <= 2048:
        tm = n_pad                      # phase 1 is overhead-bound: few/one grid steps
    else:
        tm = tile
        for mult in range(1, 512 // tile + 1):
            cand = mult * tile
            if cand <= 512 and n_pad % cand == 0:
                tm = cand
    cost1 = pl.CostEstimate(
        flops=2 * n_pad * fin * hc_ext + 2 * n_pad * hc_ext * 2 * heads,
        transcendentals=0,
        bytes_accessed=(n_pad * fin * 2 + fin * hc_ext * 2 + hc_ext * 2 * heads * 2
                        + n_pad * hc_ext * 2 + n_pad * 2 * heads * 4))
    h_ext, alpha = pl.pallas_call(
        _feat_kernel,
        grid=(n_pad // tm,),
        in_specs=[
            pl.BlockSpec((tm, fin), lambda i: (i, 0)),
            pl.BlockSpec((fin, hc_ext), lambda i: (0, 0)),
            pl.BlockSpec((1, hc_ext), lambda i: (0, 0)),
            pl.BlockSpec((hc_ext, 2 * heads), lambda i: (0, 0)),
        ],
        out_specs=(
            pl.BlockSpec((tm, hc_ext), lambda i: (i, 0)),
            pl.BlockSpec((tm, 2 * heads), lambda i: (i, 0)),
        ),
        out_shape=(
            jax.ShapeDtypeStruct((n_pad, hc_ext), jnp.bfloat16),
            jax.ShapeDtypeStruct((n_pad, 2 * heads), jnp.float32),
        ),
        compiler_params=pltpu.CompilerParams(dimension_semantics=("parallel",),
                                             vmem_limit_bytes=vmem_limit),
        cost_estimate=cost1,
    )(x_bf, w_ext, ones_row, att_cat)

    # Split / transpose logits once (tiny XLA glue): src as [H, N], dst as [N, H].
    alpha_src_T = alpha[:, :heads].T
    alpha_dst = alpha[:, heads:]

    # ---- Phase 2: online-softmax attention, (dst rows x src blocks) grid ----
    ti = tj = tile
    kernel = functools.partial(_attn_kernel, heads=heads, out_ch=out_ch,
                               concat=concat, apply_elu=apply_elu,
                               exp_dtype=_exp_dtype())
    cost2 = pl.CostEstimate(
        flops=2 * heads * n_pad * n_pad * cext + 8 * heads * n_pad * n_pad,
        transcendentals=heads * n_pad * n_pad,
        bytes_accessed=(n_pad * n_pad * 1 + (n_pad // ti) * n_pad * hc_ext * 2
                        + n_pad * 2 * heads * 4 + n_pad * out_dim * 4))
    out = pl.pallas_call(
        kernel,
        grid=(n_pad // ti, n_pad // tj),
        in_specs=[
            pl.BlockSpec((ti, heads), lambda i, j: (i, 0)),     # alpha_dst rows
            pl.BlockSpec((heads, tj), lambda i, j: (0, j)),     # alpha_src^T columns
            pl.BlockSpec((tj, hc_ext), lambda i, j: (j, 0)),    # h_ext blocks (streamed)
            pl.BlockSpec((ti, tj), lambda i, j: (i, j)),        # adj blocks (streamed)
            pl.BlockSpec((1, out_dim), lambda i, j: (0, 0)),    # bias
        ],
        out_specs=pl.BlockSpec((ti, out_dim), lambda i, j: (i, 0)),
        out_shape=jax.ShapeDtypeStruct((n_pad, out_dim), out_dtype),
        scratch_shapes=[
            pltpu.VMEM((heads, ti, 1), jnp.float32),            # running max per head
            pltpu.VMEM((heads, ti, cext), jnp.float32),         # numerator + denominator
        ],
        compiler_params=pltpu.CompilerParams(
            dimension_semantics=("parallel", "arbitrary"),      # i sharded across TCs (v7x)
            vmem_limit_bytes=vmem_limit),
        cost_estimate=cost2,
    )(alpha_dst, alpha_src_T, h_ext, adj_i8, bias2)
    return out


# ---------------------------------------------------------------------------
# Parameter init + full forward (matches the PyTorch GAT module structure).
# ---------------------------------------------------------------------------
def init_gat_params(key, in_channels, hidden_channels, out_channels,
                    num_layers, heads):
    layers = []

    def make_layer(key, fin, c, h, concat):
        k1, k2, k3 = jax.random.split(key, 3)
        scale_w = (2.0 / (fin + h * c)) ** 0.5
        w = scale_w * jax.random.normal(k1, (fin, h * c), jnp.float32)
        att_src = 0.1 * jax.random.normal(k2, (h, c), jnp.float32)
        att_dst = 0.1 * jax.random.normal(k3, (h, c), jnp.float32)
        bias = jnp.zeros((h * c if concat else c,), jnp.float32)
        return (w, att_src, att_dst, bias), dict(heads=h, out_ch=c, concat=concat)

    keys = jax.random.split(key, num_layers)
    p, cfg = make_layer(keys[0], in_channels, hidden_channels, heads, True)
    layers.append((p, cfg))
    for li in range(num_layers - 2):
        p, cfg = make_layer(keys[1 + li], hidden_channels * heads,
                            hidden_channels, heads, True)
        layers.append((p, cfg))
    p, cfg = make_layer(keys[-1], hidden_channels * heads, out_channels, 1, False)
    layers.append((p, cfg))
    return layers


def gat_forward(x, adj_i8, layers):
    n = x.shape[0]
    tile = 256 if n >= 1024 else 128
    n_pad = _round_up(n, tile)
    if n_pad != n:
        x = jnp.pad(x, ((0, n_pad - n), (0, 0)))
        adj_i8 = jnp.pad(adj_i8, ((0, n_pad - n), (0, n_pad - n)))
    for li, (params, cfg) in enumerate(layers):
        last = li == len(layers) - 1
        x = gat_conv(x, adj_i8, params, heads=cfg["heads"], out_ch=cfg["out_ch"],
                     concat=cfg["concat"], apply_elu=not last, tile=tile,
                     out_dtype=jnp.float32 if last else jnp.bfloat16)
        # F.dropout(..., training=False) between layers is identity (eval mode).
    return x[:n]


if __name__ == "__main__":
    # Small synthetic "Reddit-like" mini-batch. N is NOT a tile multiple on purpose:
    # exercises padding, the (i, j) grid, and the online-softmax accumulation.
    N = 300
    in_channels = 32
    hidden_channels = 8
    heads = 4
    out_channels = 16  # number of classes
    num_layers = 3

    key = jax.random.PRNGKey(0)
    k_feat, k_adj, k_par = jax.random.split(key, 3)

    x = jax.random.normal(k_feat, (N, in_channels), jnp.float32)

    # Random sparse directed adjacency (~8 in-neighbors per node) + self loops
    # (GATConv adds self loops by default). Stored as a 1-byte mask.
    adj = jax.random.uniform(k_adj, (N, N)) < (8.0 / N)
    adj = jnp.logical_or(adj, jnp.eye(N, dtype=bool)).astype(jnp.int8)

    layers = init_gat_params(k_par, in_channels, hidden_channels, out_channels,
                             num_layers, heads)

    out = gat_forward(x, adj, layers)
    jax.block_until_ready(out)
    assert out.shape == (N, out_channels), out.shape
    print("KERNEL_OK")
</pallas_src>

<mosaic_0001>
module attributes {stable_mosaic.version = 11 : i64} {
  func.func @_feat_kernel(%arg0: i32, %arg1: memref<384x32xbf16, #tpu.memory_space<vmem>>, %arg2: memref<32x36xbf16, #tpu.memory_space<vmem>>, %arg3: memref<1x36xf32, #tpu.memory_space<vmem>>, %arg4: memref<36x8xbf16, #tpu.memory_space<vmem>>, %arg5: memref<384x36xbf16, #tpu.memory_space<vmem>>, %arg6: memref<384x8xf32, #tpu.memory_space<vmem>>) attributes {dimension_semantics = [#tpu.dimension_semantics<parallel>], iteration_bounds = array<i64: 1>, scalar_prefetch = 0 : i64, scratch_operands = 0 : i64, tpu.core_type = #tpu.core_type<tc>, window_params = [{transform_indices = @transform_0, window_bounds = array<i64: 384, 32>}, {pipeline_mode = #tpu.pipeline_mode<synchronous>, transform_indices = @transform_1, window_bounds = array<i64: 32, 36>}, {pipeline_mode = #tpu.pipeline_mode<synchronous>, transform_indices = @transform_2, window_bounds = array<i64: 1, 36>}, {pipeline_mode = #tpu.pipeline_mode<synchronous>, transform_indices = @transform_3, window_bounds = array<i64: 36, 8>}, {transform_indices = @transform_4, window_bounds = array<i64: 384, 36>}, {transform_indices = @transform_5, window_bounds = array<i64: 384, 8>}]} {
    %c0 = arith.constant 0 : index
    %c0_0 = arith.constant 0 : index
    %0 = vector.load %arg1[%c0, %c0_0] : memref<384x32xbf16, #tpu.memory_space<vmem>>, vector<384x32xbf16>
    %c0_1 = arith.constant 0 : index
    %c0_2 = arith.constant 0 : index
    %1 = vector.load %arg2[%c0_1, %c0_2] : memref<32x36xbf16, #tpu.memory_space<vmem>>, vector<32x36xbf16>
    %cst = arith.constant dense<0.000000e+00> : vector<384x36xf32>
    %2 = tpu.matmul %0, %1, %cst {dimension_numbers = #tpu.dot_dimension_numbers<[1], [0], [0], [1], [0, 0, 1, 1], [], []>} : vector<384x32xbf16>, vector<32x36xbf16>, vector<384x36xf32> -> vector<384x36xf32>
    %c0_3 = arith.constant 0 : index
    %c0_4 = arith.constant 0 : index
    %3 = vector.load %arg3[%c0_3, %c0_4] : memref<1x36xf32, #tpu.memory_space<vmem>>, vector<1x36xf32>
    %4 = vector.broadcast %3 : vector<1x36xf32> to vector<384x36xf32>
    %5 = arith.addf %2, %4 : vector<384x36xf32>
    %6 = arith.truncf %5 : vector<384x36xf32> to vector<384x36xbf16>
    %c0_5 = arith.constant 0 : index
    %c0_6 = arith.constant 0 : index
    %7 = vector.load %arg4[%c0_5, %c0_6] : memref<36x8xbf16, #tpu.memory_space<vmem>>, vector<36x8xbf16>
    %cst_7 = arith.constant dense<0.000000e+00> : vector<384x8xf32>
    %8 = tpu.matmul %6, %7, %cst_7 {dimension_numbers = #tpu.dot_dimension_numbers<[1], [0], [0], [1], [0, 0, 1, 1], [], []>} : vector<384x36xbf16>, vector<36x8xbf16>, vector<384x8xf32> -> vector<384x8xf32>
    %c0_8 = arith.constant 0 : index
    %c0_9 = arith.constant 0 : index
    %9 = vector.load %arg5[%c0_8, %c0_9] : memref<384x36xbf16, #tpu.memory_space<vmem>>, vector<384x36xbf16>
    tpu.vector_store %arg5[%c0_8, %c0_9], %6 {strides = array<i32>} : memref<384x36xbf16, #tpu.memory_space<vmem>>, vector<384x36xbf16>,
    %c0_10 = arith.constant 0 : index
    %c0_11 = arith.constant 0 : index
    %10 = vector.load %arg6[%c0_10, %c0_11] : memref<384x8xf32, #tpu.memory_space<vmem>>, vector<384x8xf32>
    tpu.vector_store %arg6[%c0_10, %c0_11], %8 {strides = array<i32>} : memref<384x8xf32, #tpu.memory_space<vmem>>, vector<384x8xf32>,
    return
  }
  func.func @transform_0(%arg0: i32) -> (i32, i32) {
    %c0_i32 = arith.constant 0 : i32
    %c0_i32_0 = arith.constant 0 : i32
    return %arg0, %c0_i32 : i32, i32
  }
  func.func @transform_1(%arg0: i32) -> (i32, i32) {
    %c0_i32 = arith.constant 0 : i32
    %c0_i32_0 = arith.constant 0 : i32
    %c0_i32_1 = arith.constant 0 : i32
    return %c0_i32, %c0_i32_0 : i32, i32
  }
  func.func @transform_2(%arg0: i32) -> (i32, i32) {
    %c0_i32 = arith.constant 0 : i32
    %c0_i32_0 = arith.constant 0 : i32
    %c0_i32_1 = arith.constant 0 : i32
    return %c0_i32, %c0_i32_0 : i32, i32
  }
  func.func @transform_3(%arg0: i32) -> (i32, i32) {
    %c0_i32 = arith.constant 0 : i32
    %c0_i32_0 = arith.constant 0 : i32
    %c0_i32_1 = arith.constant 0 : i32
    return %c0_i32, %c0_i32_0 : i32, i32
  }
  func.func @transform_4(%arg0: i32) -> (i32, i32) {
    %c0_i32 = arith.constant 0 : i32
    %c0_i32_0 = arith.constant 0 : i32
    return %arg0, %c0_i32 : i32, i32
  }
  func.func @transform_5(%arg0: i32) -> (i32, i32) {
    %c0_i32 = arith.constant 0 : i32
    %c0_i32_0 = arith.constant 0 : i32
    return %arg0, %c0_i32 : i32, i32
  }
}

</mosaic_0001>

<llo_original>
// kernel: tpu_custom_call.1
$region0: #{tpu_custom_call.1}
  #allocation0 [shape = 'u32[]', space=smem, size = 0x4, offset = 0x4, fixed_abs, tag = 'smem constant byte address 0x4 - core index']
  #allocation1 [shape = 'u32[144,128]{1,0:T(1,128)}', space=vmem, size = 0x12000, scoped, tag = 'internal scratch']
  %s0 = inlined_call_operand.vmem [shape: bf16[384,32], index: 0, kind: input, shape index: {}]
  %s1 = inlined_call_operand.vmem [shape: bf16[32,36], index: 1, kind: input, shape index: {}]
  %s2 = inlined_call_operand.vmem [shape: f32[1,36], index: 2, kind: input, shape index: {}]
  %s3 = inlined_call_operand.vmem [shape: bf16[36,8], index: 3, kind: input, shape index: {}]
  %s4 = inlined_call_operand.vmem [shape: bf16[384,36], index: 4, kind: output, shape index: {0}]
  %s5 = inlined_call_operand.vmem [shape: f32[384,8], index: 5, kind: output, shape index: {1}]
  %6 = xla_tuple %s4, %s5
  %s7 = sld [smem:[#allocation0]]
  $region34: #{tpu_custom_call.1} parent=0
    _
  %s9 = ssub.s32 1, %s7
  %s10 = scalar_select 0, %s9, %s7
  // Predicated region
  $region2: #{tpu_custom_call.1} parent=0 // pred_check
    _
  $region3: #{tpu_custom_call.1} parent=0 // pred_check_branch
    %12 = sbr.rel (0) target = $region5
  $region4: #{tpu_custom_call.1} parent=0 // pred_region
    _
  $region5: #{tpu_custom_call.1} parent=0 // pred_fallthru
    _
  // Predicated region
  $region6: #{tpu_custom_call.1} parent=0 // pred_check
    _
  $region7: #{tpu_custom_call.1} parent=0 // pred_check_branch
    %14 = sbr.rel (0) target = $region9
  $region8: #{tpu_custom_call.1} parent=0 // pred_region
    _
  $region9: #{tpu_custom_call.1} parent=0 // pred_fallthru
    _
  // Predicated region
  $region10: #{tpu_custom_call.1} parent=0 // pred_check
    _
  $region11: #{tpu_custom_call.1} parent=0 // pred_check_branch
    %16 = sbr.rel (0) target = $region13
  $region12: #{tpu_custom_call.1} parent=0 // pred_region
    _
  $region13: #{tpu_custom_call.1} parent=0 // pred_fallthru
    _
  // Predicated region
  $region14: #{tpu_custom_call.1} parent=0 // pred_check
    _
  $region15: #{tpu_custom_call.1} parent=0 // pred_check_branch
    %18 = sbr.rel (0) target = $region17
  $region16: #{tpu_custom_call.1} parent=0 // pred_region
    _
  $region17: #{tpu_custom_call.1} parent=0 // pred_fallthru
    _
  %v20 = vld [vmem:[%s0] sm:$0xf]
  %v21 = vld [vmem:[%s0 + $0x4] sm:$0xf]
  %v22 = vld [vmem:[%s0 + $0x8] sm:$0xf]
  %v23 = vld [vmem:[%s0 + $0xc] sm:$0xf]
  %v24 = vld [vmem:[%s0 + $0x10] sm:$0xf]
  %v25 = vld [vmem:[%s0 + $0x14] sm:$0xf]
  %v26 = vld [vmem:[%s0 + $0x18] sm:$0xf]
  %v27 = vld [vmem:[%s0 + $0x1c] sm:$0xf]
  %v28 = vld [vmem:[%s0 + $0x20] sm:$0xf]
  %v29 = vld [vmem:[%s0 + $0x24] sm:$0xf]
  %v30 = vld [vmem:[%s0 + $0x28] sm:$0xf]
  %v31 = vld [vmem:[%s0 + $0x2c] sm:$0xf]
  %v32 = vld [vmem:[%s0 + $0x30] sm:$0xf]
  %v33 = vld [vmem:[%s0 + $0x34] sm:$0xf]
  %v34 = vld [vmem:[%s0 + $0x38] sm:$0xf]
  %v35 = vld [vmem:[%s0 + $0x3c] sm:$0xf]
  %v36 = vld [vmem:[%s0 + $0x40] sm:$0xf]
  %v37 = vld [vmem:[%s0 + $0x44] sm:$0xf]
  %v38 = vld [vmem:[%s0 + $0x48] sm:$0xf]
  %v39 = vld [vmem:[%s0 + $0x4c] sm:$0xf]
  %v40 = vld [vmem:[%s0 + $0x50] sm:$0xf]
  %v41 = vld [vmem:[%s0 + $0x54] sm:$0xf]
  %v42 = vld [vmem:[%s0 + $0x58] sm:$0xf]
  %v43 = vld [vmem:[%s0 + $0x5c] sm:$0xf]
  %v44 = vld [vmem:[%s0 + $0x60] sm:$0xf]
  %v45 = vld [vmem:[%s0 + $0x64] sm:$0xf]
  %v46 = vld [vmem:[%s0 + $0x68] sm:$0xf]
  %v47 = vld [vmem:[%s0 + $0x6c] sm:$0xf]
  %v48 = vld [vmem:[%s0 + $0x70] sm:$0xf]
  %v49 = vld [vmem:[%s0 + $0x74] sm:$0xf]
  %v50 = vld [vmem:[%s0 + $0x78] sm:$0xf]
  %v51 = vld [vmem:[%s0 + $0x7c] sm:$0xf]
  %v52 = vld [vmem:[%s0 + $0x80] sm:$0xf]
  %v53 = vld [vmem:[%s0 + $0x84] sm:$0xf]
  %v54 = vld [vmem:[%s0 + $0x88] sm:$0xf]
  %v55 = vld [vmem:[%s0 + $0x8c] sm:$0xf]
  %v56 = vld [vmem:[%s0 + $0x90] sm:$0xf]
  %v57 = vld [vmem:[%s0 + $0x94] sm:$0xf]
  %v58 = vld [vmem:[%s0 + $0x98] sm:$0xf]
  %v59 = vld [vmem:[%s0 + $0x9c] sm:$0xf]
  %v60 = vld [vmem:[%s0 + $0xa0] sm:$0xf]
  %v61 = vld [vmem:[%s0 + $0xa4] sm:$0xf]
  %v62 = vld [vmem:[%s0 + $0xa8] sm:$0xf]
  %v63 = vld [vmem:[%s0 + $0xac] sm:$0xf]
  %v64 = vld [vmem:[%s0 + $0xb0] sm:$0xf]
  %v65 = vld [vmem:[%s0 + $0xb4] sm:$0xf]
  %v66 = vld [vmem:[%s0 + $0xb8] sm:$0xf]
  %v67 = vld [vmem:[%s0 + $0xbc] sm:$0xf]
  %v68 = vld [vmem:[%s1] sm:$0xf]
  %v69 = vld [vmem:[%s1 + $0x4] sm:$0xf]
  %v70 = vld [vmem:[%s1 + $0x8] sm:$0xf]
  %v71 = vld [vmem:[%s1 + $0xc] sm:$0xf]
  %v72 = vld [vmem:[%s2] sm:$0x1]
  %v74 = vlaneseq
  %v75 = vshrl.u32 %v74, 7
  %v76 = vsub.s32 0, %v75
  %v77 = vrot.slane %v72, %v76
  %v127 = vunpack.c.l.b16 %v20
  %v128 = vunpack.c.l.b16 %v21
  %v129 = vunpack.c.l.b16 %v22
  %v130 = vunpack.c.l.b16 %v23
  %v131 = vunpack.c.l.b16 %v24
  %v132 = vunpack.c.l.b16 %v25
  %v133 = vunpack.c.l.b16 %v26
  %v134 = vunpack.c.l.b16 %v27
  %v135 = vunpack.c.l.b16 %v28
  %v136 = vunpack.c.l.b16 %v29
  %v137 = vunpack.c.l.b16 %v30
  %v138 = vunpack.c.l.b16 %v31
  %v139 = vunpack.c.l.b16 %v32
  %v140 = vunpack.c.l.b16 %v33
  %v141 = vunpack.c.l.b16 %v34
  %v142 = vunpack.c.l.b16 %v35
  %v143 = vunpack.c.l.b16 %v36
  %v144 = vunpack.c.l.b16 %v37
  %v145 = vunpack.c.l.b16 %v38
  %v146 = vunpack.c.l.b16 %v39
  %v147 = vunpack.c.l.b16 %v40
  %v148 = vunpack.c.l.b16 %v41
  %v149 = vunpack.c.l.b16 %v42
  %v150 = vunpack.c.l.b16 %v43
  %v151 = vunpack.c.l.b16 %v44
  %v152 = vunpack.c.l.b16 %v45
  %v153 = vunpack.c.l.b16 %v46
  %v154 = vunpack.c.l.b16 %v47
  %v155 = vunpack.c.l.b16 %v48
  %v156 = vunpack.c.l.b16 %v49
  %v157 = vunpack.c.l.b16 %v50
  %v158 = vunpack.c.l.b16 %v51
  %v159 = vunpack.c.l.b16 %v52
  %v160 = vunpack.c.l.b16 %v53
  %v161 = vunpack.c.l.b16 %v54
  %v162 = vunpack.c.l.b16 %v55
  %v163 = vunpack.c.l.b16 %v56
  %v164 = vunpack.c.l.b16 %v57
  %v165 = vunpack.c.l.b16 %v58
  %v166 = vunpack.c.l.b16 %v59
  %v167 = vunpack.c.l.b16 %v60
  %v168 = vunpack.c.l.b16 %v61
  %v169 = vunpack.c.l.b16 %v62
  %v170 = vunpack.c.l.b16 %v63
  %v171 = vunpack.c.l.b16 %v64
  %v172 = vunpack.c.l.b16 %v65
  %v173 = vunpack.c.l.b16 %v66
  %v174 = vunpack.c.l.b16 %v67
  %v175 = vpack.c.b16 %v128, %v127
  %v176 = vpack.c.b16 %v130, %v129
  %v177 = vpack.c.b16 %v132, %v131
  %v178 = vpack.c.b16 %v134, %v133
  %v179 = vpack.c.b16 %v136, %v135
  %v180 = vpack.c.b16 %v138, %v137
  %v181 = vpack.c.b16 %v140, %v139
  %v182 = vpack.c.b16 %v142, %v141
  %v183 = vpack.c.b16 %v144, %v143
  %v184 = vpack.c.b16 %v146, %v145
  %v185 = vpack.c.b16 %v148, %v147
  %v186 = vpack.c.b16 %v150, %v149
  %v187 = vpack.c.b16 %v152, %v151
  %v188 = vpack.c.b16 %v154, %v153
  %v189 = vpack.c.b16 %v156, %v155
  %v190 = vpack.c.b16 %v158, %v157
  %v191 = vpack.c.b16 %v160, %v159
  %v192 = vpack.c.b16 %v162, %v161
  %v193 = vpack.c.b16 %v164, %v163
  %v194 = vpack.c.b16 %v166, %v165
  %v195 = vpack.c.b16 %v168, %v167
  %v196 = vpack.c.b16 %v170, %v169
  %v197 = vpack.c.b16 %v172, %v171
  %v198 = vpack.c.b16 %v174, %v173
  %v203 = vunpack.c.l.b16 %v68
  %v204 = vunpack.c.l.b16 %v69
  %v205 = vunpack.c.l.b16 %v70
  %v206 = vunpack.c.l.b16 %v71
  %v207 = vpack.c.b16 %v204, %v203
  %v208 = vpack.c.b16 %v206, %v205
  %vm211 = vcmask 261120
  %v213 = vsel %vm211, %v175, 0
  %v216 = vsel %vm211, %v176, 0
  %v219 = vsel %vm211, %v177, 0
  %v222 = vsel %vm211, %v178, 0
  %v225 = vsel %vm211, %v179, 0
  %v228 = vsel %vm211, %v180, 0
  %v231 = vsel %vm211, %v181, 0
  %v234 = vsel %vm211, %v182, 0
  %v237 = vsel %vm211, %v183, 0
  %v240 = vsel %vm211, %v184, 0
  %v243 = vsel %vm211, %v185, 0
  %v246 = vsel %vm211, %v186, 0
  %v249 = vsel %vm211, %v187, 0
  %v252 = vsel %vm211, %v188, 0
  %v255 = vsel %vm211, %v189, 0
  %v258 = vsel %vm211, %v190, 0
  %v261 = vsel %vm211, %v191, 0
  %v264 = vsel %vm211, %v192, 0
  %v267 = vsel %vm211, %v193, 0
  %v270 = vsel %vm211, %v194, 0
  %v273 = vsel %vm211, %v195, 0
  %v276 = vsel %vm211, %v196, 0
  %v279 = vsel %vm211, %v197, 0
  %v282 = vsel %vm211, %v198, 0
  %284 = vmatprep.subr.bf16.mxu0 0
  %285 = vmatpush1.bf16.msra.mxu0 %v207
  %286 = vmatprep.subr.bf16.mxu0 0
  %287 = vmatpush1.bf16.msra.mxu0 %v208
  %288 = vmatprep.subr.bf16.mxu0 0
  %289 = vmatpush1.bf16.msra.mxu0 0
  %290 = vmatprep.subr.bf16.mxu0 0
  %291 = vmatpush1.bf16.msra.mxu0 0
  %292 = vmatprep.subr.bf16.mxu0 0
  %293 = vmatpush1.bf16.msra.mxu0 0
  %294 = vmatprep.subr.bf16.mxu0 0
  %295 = vmatpush1.bf16.msra.mxu0 0
  %296 = vmatprep.subr.bf16.mxu0 0
  %297 = vmatpush1.bf16.msra.mxu0 0
  %298 = vmatprep.subr.bf16.mxu0 0
  %299 = vmatpush1.bf16.msra.mxu0 0
  %300 = vmatprep.subr.bf16.mxu0 0
  %301 = vmatpush1.bf16.msra.mxu0 0
  %302 = vmatprep.subr.bf16.mxu0 0
  %303 = vmatpush1.bf16.msra.mxu0 0
  %304 = vmatprep.subr.bf16.mxu0 0
  %305 = vmatpush1.bf16.msra.mxu0 0
  %306 = vmatprep.subr.bf16.mxu0 0
  %307 = vmatpush1.bf16.msra.mxu0 0
  %308 = vmatprep.subr.bf16.mxu0 0
  %309 = vmatpush1.bf16.msra.mxu0 0
  %310 = vmatprep.subr.bf16.mxu0 0
  %311 = vmatpush1.bf16.msra.mxu0 0
  %312 = vmatprep.subr.bf16.mxu0 0
  %313 = vmatpush1.bf16.msra.mxu0 0
  %314 = vmatprep.subr.bf16.mxu0 0
  %315 = vmatpush1.bf16.msra.mxu0 0
  %316 = vmatprep.mubr.bf16.mxu0 0
  %317 = vmatmul.mubr.bf16.gmra.mrb[0].mxu0 %v213
  %v318 = vpop.f32.mrb[0].mxu0
  %v319 = vadd.f32 %v77, %v318
  %v320 = vpop.f32.mrb[0].mxu0
  %v321 = vpop.f32.mrb[0].mxu0
  %v322 = vadd.f32 %v77, %v321
  %v323 = vpop.f32.mrb[0].mxu0
  %324 = vmatprep.mubr.bf16.mxu0 0
  %325 = vmatmul.mubr.bf16.gmra.mrb[0].mxu0 %v216
  %v326 = vpop.f32.mrb[0].mxu0
  %v327 = vadd.f32 %v77, %v326
  %v328 = vpop.f32.mrb[0].mxu0
  %v329 = vpop.f32.mrb[0].mxu0
  %v330 = vadd.f32 %v77, %v329
  %v331 = vpop.f32.mrb[0].mxu0
  %332 = vmatprep.mubr.bf16.mxu0 0
  %333 = vmatmul.mubr.bf16.gmra.mrb[0].mxu0 %v219
  %v334 = vpop.f32.mrb[0].mxu0
  %v335 = vadd.f32 %v77, %v334
  %v336 = vpop.f32.mrb[0].mxu0
  %v337 = vpop.f32.mrb[0].mxu0
  %v338 = vadd.f32 %v77, %v337
  %v339 = vpop.f32.mrb[0].mxu0
  %340 = vmatprep.mubr.bf16.mxu0 0
  %341 = vmatmul.mubr.bf16.gmra.mrb[0].mxu0 %v222
  %v342 = vpop.f32.mrb[0].mxu0
  %v343 = vadd.f32 %v77, %v342
  %v344 = vpop.f32.mrb[0].mxu0
  %v345 = vpop.f32.mrb[0].mxu0
  %v346 = vadd.f32 %v77, %v345
  %v347 = vpop.f32.mrb[0].mxu0
  %348 = vmatprep.mubr.bf16.mxu0 0
  %349 = vmatmul.mubr.bf16.gmra.mrb[0].mxu0 %v225
  %v350 = vpop.f32.mrb[0].mxu0
  %v351 = vadd.f32 %v77, %v350
  %v352 = vpop.f32.mrb[0].mxu0
  %v353 = vpop.f32.mrb[0].mxu0
  %v354 = vadd.f32 %v77, %v353
  %v355 = vpop.f32.mrb[0].mxu0
  %356 = vmatprep.mubr.bf16.mxu0 0
  %357 = vmatmul.mubr.bf16.gmra.mrb[0].mxu0 %v228
  %v358 = vpop.f32.mrb[0].mxu0
  %v359 = vadd.f32 %v77, %v358
  %v360 = vpop.f32.mrb[0].mxu0
  %v361 = vpop.f32.mrb[0].mxu0
  %v362 = vadd.f32 %v77, %v361
  %v363 = vpop.f32.mrb[0].mxu0
  %364 = vmatprep.mubr.bf16.mxu0 0
  %365 = vmatmul.mubr.bf16.gmra.mrb[0].mxu0 %v231
  %v366 = vpop.f32.mrb[0].mxu0
  %v367 = vadd.f32 %v77, %v366
  %v368 = vpop.f32.mrb[0].mxu0
  %v369 = vpop.f32.mrb[0].mxu0
  %v370 = vadd.f32 %v77, %v369
  %v371 = vpop.f32.mrb[0].mxu0
  %372 = vmatprep.mubr.bf16.mxu0 0
  %373 = vmatmul.mubr.bf16.gmra.mrb[0].mxu0 %v234
  %v374 = vpop.f32.mrb[0].mxu0
  %v375 = vadd.f32 %v77, %v374
  %v376 = vpop.f32.mrb[0].mxu0
  %v377 = vpop.f32.mrb[0].mxu0
  %v378 = vadd.f32 %v77, %v377
  %v379 = vpop.f32.mrb[0].mxu0
  %380 = vmatprep.mubr.bf16.mxu0 0
  %381 = vmatmul.mubr.bf16.gmra.mrb[0].mxu0 %v237
  %v382 = vpop.f32.mrb[0].mxu0
  %v383 = vadd.f32 %v77, %v382
  %v384 = vpop.f32.mrb[0].mxu0
  %v385 = vpop.f32.mrb[0].mxu0
  %v386 = vadd.f32 %v77, %v385
  %v387 = vpop.f32.mrb[0].mxu0
  %388 = vmatprep.mubr.bf16.mxu0 0
  %389 = vmatmul.mubr.bf16.gmra.mrb[0].mxu0 %v240
  %v390 = vpop.f32.mrb[0].mxu0
  %v391 = vadd.f32 %v77, %v390
  %v392 = vpop.f32.mrb[0].mxu0
  %v393 = vpop.f32.mrb[0].mxu0
  %v394 = vadd.f32 %v77, %v393
  %v395 = vpop.f32.mrb[0].mxu0
  %396 = vmatprep.mubr.bf16.mxu0 0
  %397 = vmatmul.mubr.bf16.gmra.mrb[0].mxu0 %v243
  %v398 = vpop.f32.mrb[0].mxu0
  %v399 = vadd.f32 %v77, %v398
  %v400 = vpop.f32.mrb[0].mxu0
  %v401 = vpop.f32.mrb[0].mxu0
  %v402 = vadd.f32 %v77, %v401
  %v403 = vpop.f32.mrb[0].mxu0
  %404 = vmatprep.mubr.bf16.mxu0 0
  %405 = vmatmul.mubr.bf16.gmra.mrb[0].mxu0 %v246
  %v406 = vpop.f32.mrb[0].mxu0
  %v407 = vadd.f32 %v77, %v406
  %v408 = vpop.f32.mrb[0].mxu0
  %v409 = vpop.f32.mrb[0].mxu0
  %v410 = vadd.f32 %v77, %v409
  %v411 = vpop.f32.mrb[0].mxu0
  %412 = vmatprep.mubr.bf16.mxu0 0
  %413 = vmatmul.mubr.bf16.gmra.mrb[0].mxu0 %v249
  %v414 = vpop.f32.mrb[0].mxu0
  %v415 = vadd.f32 %v77, %v414
  %v416 = vpop.f32.mrb[0].mxu0
  %v417 = vpop.f32.mrb[0].mxu0
  %v418 = vadd.f32 %v77, %v417
  %v419 = vpop.f32.mrb[0].mxu0
  %420 = vmatprep.mubr.bf16.mxu0 0
  %421 = vmatmul.mubr.bf16.gmra.mrb[0].mxu0 %v252
  %v422 = vpop.f32.mrb[0].mxu0
  %v423 = vadd.f32 %v77, %v422
  %v424 = vpop.f32.mrb[0].mxu0
  %v425 = vpop.f32.mrb[0].mxu0
  %v426 = vadd.f32 %v77, %v425
  %v427 = vpop.f32.mrb[0].mxu0
  %428 = vmatprep.mubr.bf16.mxu0 0
  %429 = vmatmul.mubr.bf16.gmra.mrb[0].mxu0 %v255
  %v430 = vpop.f32.mrb[0].mxu0
  %v431 = vadd.f32 %v77, %v430
  %v432 = vpop.f32.mrb[0].mxu0
  %v433 = vpop.f32.mrb[0].mxu0
  %v434 = vadd.f32 %v77, %v433
  %v435 = vpop.f32.mrb[0].mxu0
  %436 = vmatprep.mubr.bf16.mxu0 0
  %437 = vmatmul.mubr.bf16.gmra.mrb[0].mxu0 %v258
  %v438 = vpop.f32.mrb[0].mxu0
  %v439 = vadd.f32 %v77, %v438
  %v440 = vpop.f32.mrb[0].mxu0
  %v441 = vpop.f32.mrb[0].mxu0
  %v442 = vadd.f32 %v77, %v441
  %v443 = vpop.f32.mrb[0].mxu0
  %444 = vmatprep.mubr.bf16.mxu0 0
  %445 = vmatmul.mubr.bf16.gmra.mrb[0].mxu0 %v261
  %v446 = vpop.f32.mrb[0].mxu0
  %v447 = vadd.f32 %v77, %v446
  %v448 = vpop.f32.mrb[0].mxu0
  %v449 = vpop.f32.mrb[0].mxu0
  %v450 = vadd.f32 %v77, %v449
  %v451 = vpop.f32.mrb[0].mxu0
  %452 = vmatprep.mubr.bf16.mxu0 0
  %453 = vmatmul.mubr.bf16.gmra.mrb[0].mxu0 %v264
  %v454 = vpop.f32.mrb[0].mxu0
  %v455 = vadd.f32 %v77, %v454
  %v456 = vpop.f32.mrb[0].mxu0
  %v457 = vpop.f32.mrb[0].mxu0
  %v458 = vadd.f32 %v77, %v457
  %v459 = vpop.f32.mrb[0].mxu0
  %460 = vmatprep.mubr.bf16.mxu0 0
  %461 = vmatmul.mubr.bf16.gmra.mrb[0].mxu0 %v267
  %v462 = vpop.f32.mrb[0].mxu0
  %v463 = vadd.f32 %v77, %v462
  %v464 = vpop.f32.mrb[0].mxu0
  %v465 = vpop.f32.mrb[0].mxu0
  %v466 = vadd.f32 %v77, %v465
  %v467 = vpop.f32.mrb[0].mxu0
  %468 = vmatprep.mubr.bf16.mxu0 0
  %469 = vmatmul.mubr.bf16.gmra.mrb[0].mxu0 %v270
  %v470 = vpop.f32.mrb[0].mxu0
  %v471 = vadd.f32 %v77, %v470
  %v472 = vpop.f32.mrb[0].mxu0
  %v473 = vpop.f32.mrb[0].mxu0
  %v474 = vadd.f32 %v77, %v473
  %v475 = vpop.f32.mrb[0].mxu0
  %476 = vmatprep.mubr.bf16.mxu0 0
  %477 = vmatmul.mubr.bf16.gmra.mrb[0].mxu0 %v273
  %v478 = vpop.f32.mrb[0].mxu0
  %v479 = vadd.f32 %v77, %v478
  %v480 = vpop.f32.mrb[0].mxu0
  %v481 = vpop.f32.mrb[0].mxu0
  %v482 = vadd.f32 %v77, %v481
  %v483 = vpop.f32.mrb[0].mxu0
  %484 = vmatprep.mubr.bf16.mxu0 0
  %485 = vmatmul.mubr.bf16.gmra.mrb[0].mxu0 %v276
  %v486 = vpop.f32.mrb[0].mxu0
  %v487 = vadd.f32 %v77, %v486
  %v488 = vpop.f32.mrb[0].mxu0
  %v489 = vpop.f32.mrb[0].mxu0
  %v490 = vadd.f32 %v77, %v489
  %v491 = vpop.f32.mrb[0].mxu0
  %492 = vmatprep.mubr.bf16.mxu0 0
  %493 = vmatmul.mubr.bf16.gmra.mrb[0].mxu0 %v279
  %v494 = vpop.f32.mrb[0].mxu0
  %v495 = vadd.f32 %v77, %v494
  %v496 = vpop.f32.mrb[0].mxu0
  %v497 = vpop.f32.mrb[0].mxu0
  %v498 = vadd.f32 %v77, %v497
  %v499 = vpop.f32.mrb[0].mxu0
  %500 = vmatprep.mubr.bf16.mxu0 0
  %501 = vmatmul.mubr.bf16.gmra.mrb[0].mxu0 %v282
  %v502 = vpop.f32.mrb[0].mxu0
  %v503 = vadd.f32 %v77, %v502
  %v504 = vpop.f32.mrb[0].mxu0
  %v505 = vpop.f32.mrb[0].mxu0
  %v506 = vadd.f32 %v77, %v505
  %v507 = vpop.f32.mrb[0].mxu0
  %508 = vdwg.mxu0
  %v509 = vpack.c.bf16 %v322, %v319
  %v510 = vpack.c.bf16 %v330, %v327
  %v511 = vpack.c.bf16 %v338, %v335
  %v512 = vpack.c.bf16 %v346, %v343
  %v513 = vpack.c.bf16 %v354, %v351
  %v514 = vpack.c.bf16 %v362, %v359
  %v515 = vpack.c.bf16 %v370, %v367
  %v516 = vpack.c.bf16 %v378, %v375
  %v517 = vpack.c.bf16 %v386, %v383
  %v518 = vpack.c.bf16 %v394, %v391
  %v519 = vpack.c.bf16 %v402, %v399
  %v520 = vpack.c.bf16 %v410, %v407
  %v521 = vpack.c.bf16 %v418, %v415
  %v522 = vpack.c.bf16 %v426, %v423
  %v523 = vpack.c.bf16 %v434, %v431
  %v524 = vpack.c.bf16 %v442, %v439
  %v525 = vpack.c.bf16 %v450, %v447
  %v526 = vpack.c.bf16 %v458, %v455
  %v527 = vpack.c.bf16 %v466, %v463
  %v528 = vpack.c.bf16 %v474, %v471
  %v529 = vpack.c.bf16 %v482, %v479
  %v530 = vpack.c.bf16 %v490, %v487
  %v531 = vpack.c.bf16 %v498, %v495
  %v532 = vpack.c.bf16 %v506, %v503
  %v533 = vld [vmem:[%s3] sm:$0xf]
  %v534 = vld [vmem:[%s3 + $0x4] sm:$0xf]
  %v535 = vld [vmem:[%s3 + $0x8] sm:$0xf]
  %v536 = vld [vmem:[%s3 + $0xc] sm:$0xf]
  %v537 = vld [vmem:[%s3 + $0x10] sm:$0x3]
  %v543 = vunpack.c.l.b16 %v533
  %v544 = vunpack.c.l.b16 %v534
  %v545 = vunpack.c.l.b16 %v535
  %v546 = vunpack.c.l.b16 %v536
  %v547 = vunpack.c.l.b16 %v537
  %v548 = vpack.c.b16 %v544, %v543
  %v549 = vpack.c.b16 %v546, %v545
  %v550 = vpack.c.b16 %v547, %v547
  %vm553 = vcmask 293888
  %v555 = vsel %vm553, %v509, 0
  %v558 = vsel %vm553, %v510, 0
  %v561 = vsel %vm553, %v511, 0
  %v564 = vsel %vm553, %v512, 0
  %v567 = vsel %vm553, %v513, 0
  %v570 = vsel %vm553, %v514, 0
  %v573 = vsel %vm553, %v515, 0
  %v576 = vsel %vm553, %v516, 0
  %v579 = vsel %vm553, %v517, 0
  %v582 = vsel %vm553, %v518, 0
  %v585 = vsel %vm553, %v519, 0
  %v588 = vsel %vm553, %v520, 0
  %v591 = vsel %vm553, %v521, 0
  %v594 = vsel %vm553, %v522, 0
  %v597 = vsel %vm553, %v523, 0
  %v600 = vsel %vm553, %v524, 0
  %v603 = vsel %vm553, %v525, 0
  %v606 = vsel %vm553, %v526, 0
  %v609 = vsel %vm553, %v527, 0
  %v612 = vsel %vm553, %v528, 0
  %v615 = vsel %vm553, %v529, 0
  %v618 = vsel %vm553, %v530, 0
  %v621 = vsel %vm553, %v531, 0
  %v624 = vsel %vm553, %v532, 0
  %vm626 = vcmask 1041408
  %v628 = vsel %vm626, %v550, 0
  %630 = vmatprep.subr.bf16.mxu0 0
  %631 = vmatpush1.bf16.msra.mxu0 %v548
  %632 = vmatprep.subr.bf16.mxu0 0
  %633 = vmatpush1.bf16.msra.mxu0 %v549
  %634 = vmatprep.subr.bf16.mxu0 0
  %635 = vmatpush1.bf16.msra.mxu0 %v628
  %636 = vmatprep.subr.bf16.mxu0 0
  %637 = vmatpush1.bf16.msra.mxu0 0
  %638 = vmatprep.subr.bf16.mxu0 0
  %639 = vmatpush1.bf16.msra.mxu0 0
  %640 = vmatprep.subr.bf16.mxu0 0
  %641 = vmatpush1.bf16.msra.mxu0 0
  %642 = vmatprep.subr.bf16.mxu0 0
  %643 = vmatpush1.bf16.msra.mxu0 0
  %644 = vmatprep.subr.bf16.mxu0 0
  %645 = vmatpush1.bf16.msra.mxu0 0
  %646 = vmatprep.subr.bf16.mxu0 0
  %647 = vmatpush1.bf16.msra.mxu0 0
  %648 = vmatprep.subr.bf16.mxu0 0
  %649 = vmatpush1.bf16.msra.mxu0 0
  %650 = vmatprep.subr.bf16.mxu0 0
  %651 = vmatpush1.bf16.msra.mxu0 0
  %652 = vmatprep.subr.bf16.mxu0 0
  %653 = vmatpush1.bf16.msra.mxu0 0
  %654 = vmatprep.subr.bf16.mxu0 0
  %655 = vmatpush1.bf16.msra.mxu0 0
  %656 = vmatprep.subr.bf16.mxu0 0
  %657 = vmatpush1.bf16.msra.mxu0 0
  %658 = vmatprep.subr.bf16.mxu0 0
  %659 = vmatpush1.bf16.msra.mxu0 0
  %660 = vmatprep.subr.bf16.mxu0 0
  %661 = vmatpush1.bf16.msra.mxu0 0
  %662 = vmatprep.mubr.bf16.mxu0 0
  %663 = vmatmul.mubr.bf16.gmra.mrb[0].mxu0 %v555
  %v664 = vpop.f32.mrb[0].mxu0
  %v665 = vadd.f32 0.0, %v664
  %v666 = vpop.f32.mrb[0].mxu0
  %v667 = vpop.f32.mrb[0].mxu0
  %v668 = vadd.f32 0.0, %v667
  %v669 = vpop.f32.mrb[0].mxu0
  %670 = vmatprep.mubr.bf16.mxu0 0
  %671 = vmatmul.mubr.bf16.gmra.mrb[0].mxu0 %v558
  %v672 = vpop.f32.mrb[0].mxu0
  %v673 = vadd.f32 0.0, %v672
  %v674 = vpop.f32.mrb[0].mxu0
  %v675 = vpop.f32.mrb[0].mxu0
  %v676 = vadd.f32 0.0, %v675
  %v677 = vpop.f32.mrb[0].mxu0
  %678 = vmatprep.mubr.bf16.mxu0 0
  %679 = vmatmul.mubr.bf16.gmra.mrb[0].mxu0 %v561
  %v680 = vpop.f32.mrb[0].mxu0
  %v681 = vadd.f32 0.0, %v680
  %v682 = vpop.f32.mrb[0].mxu0
  %v683 = vpop.f32.mrb[0].mxu0
  %v684 = vadd.f32 0.0, %v683
  %v685 = vpop.f32.mrb[0].mxu0
  %686 = vmatprep.mubr.bf16.mxu0 0
  %687 = vmatmul.mubr.bf16.gmra.mrb[0].mxu0 %v564
  %v688 = vpop.f32.mrb[0].mxu0
  %v689 = vadd.f32 0.0, %v688
  %v690 = vpop.f32.mrb[0].mxu0
  %v691 = vpop.f32.mrb[0].mxu0
  %v692 = vadd.f32 0.0, %v691
  %v693 = vpop.f32.mrb[0].mxu0
  %694 = vmatprep.mubr.bf16.mxu0 0
  %695 = vmatmul.mubr.bf16.gmra.mrb[0].mxu0 %v567
  %v696 = vpop.f32.mrb[0].mxu0
  %v697 = vadd.f32 0.0, %v696
  %v698 = vpop.f32.mrb[0].mxu0
  %v699 = vpop.f32.mrb[0].mxu0
  %v700 = vadd.f32 0.0, %v699
  %v701 = vpop.f32.mrb[0].mxu0
  %702 = vmatprep.mubr.bf16.mxu0 0
  %703 = vmatmul.mubr.bf16.gmra.mrb[0].mxu0 %v570
  %v704 = vpop.f32.mrb[0].mxu0
  %v705 = vadd.f32 0.0, %v704
  %v706 = vpop.f32.mrb[0].mxu0
  %v707 = vpop.f32.mrb[0].mxu0
  %v708 = vadd.f32 0.0, %v707
  %v709 = vpop.f32.mrb[0].mxu0
  %710 = vmatprep.mubr.bf16.mxu0 0
  %711 = vmatmul.mubr.bf16.gmra.mrb[0].mxu0 %v573
  %v712 = vpop.f32.mrb[0].mxu0
  %v713 = vadd.f32 0.0, %v712
  %v714 = vpop.f32.mrb[0].mxu0
  %v715 = vpop.f32.mrb[0].mxu0
  %v716 = vadd.f32 0.0, %v715
  %v717 = vpop.f32.mrb[0].mxu0
  %718 = vmatprep.mubr.bf16.mxu0 0
  %719 = vmatmul.mubr.bf16.gmra.mrb[0].mxu0 %v576
  %v720 = vpop.f32.mrb[0].mxu0
  %v721 = vadd.f32 0.0, %v720
  %v722 = vpop.f32.mrb[0].mxu0
  %v723 = vpop.f32.mrb[0].mxu0
  %v724 = vadd.f32 0.0, %v723
  %v725 = vpop.f32.mrb[0].mxu0
  %726 = vmatprep.mubr.bf16.mxu0 0
  %727 = vmatmul.mubr.bf16.gmra.mrb[0].mxu0 %v579
  %v728 = vpop.f32.mrb[0].mxu0
  %v729 = vadd.f32 0.0, %v728
  %v730 = vpop.f32.mrb[0].mxu0
  %v731 = vpop.f32.mrb[0].mxu0
  %v732 = vadd.f32 0.0, %v731
  %v733 = vpop.f32.mrb[0].mxu0
  %734 = vmatprep.mubr.bf16.mxu0 0
  %735 = vmatmul.mubr.bf16.gmra.mrb[0].mxu0 %v582
  %v736 = vpop.f32.mrb[0].mxu0
  %v737 = vadd.f32 0.0, %v736
  %v738 = vpop.f32.mrb[0].mxu0
  %v739 = vpop.f32.mrb[0].mxu0
  %v740 = vadd.f32 0.0, %v739
  %v741 = vpop.f32.mrb[0].mxu0
  %742 = vmatprep.mubr.bf16.mxu0 0
  %743 = vmatmul.mubr.bf16.gmra.mrb[0].mxu0 %v585
  %v744 = vpop.f32.mrb[0].mxu0
  %v745 = vadd.f32 0.0, %v744
  %v746 = vpop.f32.mrb[0].mxu0
  %v747 = vpop.f32.mrb[0].mxu0
  %v748 = vadd.f32 0.0, %v747
  %v749 = vpop.f32.mrb[0].mxu0
  %750 = vmatprep.mubr.bf16.mxu0 0
  %751 = vmatmul.mubr.bf16.gmra.mrb[0].mxu0 %v588
  %v752 = vpop.f32.mrb[0].mxu0
  %v753 = vadd.f32 0.0, %v752
  %v754 = vpop.f32.mrb[0].mxu0
  %v755 = vpop.f32.mrb[0].mxu0
  %v756 = vadd.f32 0.0, %v755
  %v757 = vpop.f32.mrb[0].mxu0
  %758 = vmatprep.mubr.bf16.mxu0 0
  %759 = vmatmul.mubr.bf16.gmra.mrb[0].mxu0 %v591
  %v760 = vpop.f32.mrb[0].mxu0
  %v761 = vadd.f32 0.0, %v760
  %v762 = vpop.f32.mrb[0].mxu0
  %v763 = vpop.f32.mrb[0].mxu0
  %v764 = vadd.f32 0.0, %v763
  %v765 = vpop.f32.mrb[0].mxu0
  %766 = vmatprep.mubr.bf16.mxu0 0
  %767 = vmatmul.mubr.bf16.gmra.mrb[0].mxu0 %v594
  %v768 = vpop.f32.mrb[0].mxu0
  %v769 = vadd.f32 0.0, %v768
  %v770 = vpop.f32.mrb[0].mxu0
  %v771 = vpop.f32.mrb[0].mxu0
  %v772 = vadd.f32 0.0, %v771
  %v773 = vpop.f32.mrb[0].mxu0
  %774 = vmatprep.mubr.bf16.mxu0 0
  %775 = vmatmul.mubr.bf16.gmra.mrb[0].mxu0 %v597
  %v776 = vpop.f32.mrb[0].mxu0
  %v777 = vadd.f32 0.0, %v776
  %v778 = vpop.f32.mrb[0].mxu0
  %v779 = vpop.f32.mrb[0].mxu0
  %v780 = vadd.f32 0.0, %v779
  %v781 = vpop.f32.mrb[0].mxu0
  %782 = vmatprep.mubr.bf16.mxu0 0
  %783 = vmatmul.mubr.bf16.gmra.mrb[0].mxu0 %v600
  %v784 = vpop.f32.mrb[0].mxu0
  %v785 = vadd.f32 0.0, %v784
  %v786 = vpop.f32.mrb[0].mxu0
  %v787 = vpop.f32.mrb[0].mxu0
  %v788 = vadd.f32 0.0, %v787
  %v789 = vpop.f32.mrb[0].mxu0
  %790 = vmatprep.mubr.bf16.mxu0 0
  %791 = vmatmul.mubr.bf16.gmra.mrb[0].mxu0 %v603
  %v792 = vpop.f32.mrb[0].mxu0
  %v793 = vadd.f32 0.0, %v792
  %v794 = vpop.f32.mrb[0].mxu0
  %v795 = vpop.f32.mrb[0].mxu0
  %v796 = vadd.f32 0.0, %v795
  %v797 = vpop.f32.mrb[0].mxu0
  %798 = vmatprep.mubr.bf16.mxu0 0
  %799 = vmatmul.mubr.bf16.gmra.mrb[0].mxu0 %v606
  %v800 = vpop.f32.mrb[0].mxu0
  %v801 = vadd.f32 0.0, %v800
  %v802 = vpop.f32.mrb[0].mxu0
  %v803 = vpop.f32.mrb[0].mxu0
  %v804 = vadd.f32 0.0, %v803
  %v805 = vpop.f32.mrb[0].mxu0
  %806 = vmatprep.mubr.bf16.mxu0 0
  %807 = vmatmul.mubr.bf16.gmra.mrb[0].mxu0 %v609
  %v808 = vpop.f32.mrb[0].mxu0
  %v809 = vadd.f32 0.0, %v808
  %v810 = vpop.f32.mrb[0].mxu0
  %v811 = vpop.f32.mrb[0].mxu0
  %v812 = vadd.f32 0.0, %v811
  %v813 = vpop.f32.mrb[0].mxu0
  %814 = vmatprep.mubr.bf16.mxu0 0
  %815 = vmatmul.mubr.bf16.gmra.mrb[0].mxu0 %v612
  %v816 = vpop.f32.mrb[0].mxu0
  %v817 = vadd.f32 0.0, %v816
  %v818 = vpop.f32.mrb[0].mxu0
  %v819 = vpop.f32.mrb[0].mxu0
  %v820 = vadd.f32 0.0, %v819
  %v821 = vpop.f32.mrb[0].mxu0
  %822 = vmatprep.mubr.bf16.mxu0 0
  %823 = vmatmul.mubr.bf16.gmra.mrb[0].mxu0 %v615
  %v824 = vpop.f32.mrb[0].mxu0
  %v825 = vadd.f32 0.0, %v824
  %v826 = vpop.f32.mrb[0].mxu0
  %v827 = vpop.f32.mrb[0].mxu0
  %v828 = vadd.f32 0.0, %v827
  %v829 = vpop.f32.mrb[0].mxu0
  %830 = vmatprep.mubr.bf16.mxu0 0
  %831 = vmatmul.mubr.bf16.gmra.mrb[0].mxu0 %v618
  %v832 = vpop.f32.mrb[0].mxu0
  %v833 = vadd.f32 0.0, %v832
  %v834 = vpop.f32.mrb[0].mxu0
  %v835 = vpop.f32.mrb[0].mxu0
  %v836 = vadd.f32 0.0, %v835
  %v837 = vpop.f32.mrb[0].mxu0
  %838 = vmatprep.mubr.bf16.mxu0 0
  %839 = vmatmul.mubr.bf16.gmra.mrb[0].mxu0 %v621
  %v840 = vpop.f32.mrb[0].mxu0
  %v841 = vadd.f32 0.0, %v840
  %v842 = vpop.f32.mrb[0].mxu0
  %v843 = vpop.f32.mrb[0].mxu0
  %v844 = vadd.f32 0.0, %v843
  %v845 = vpop.f32.mrb[0].mxu0
  %846 = vmatprep.mubr.bf16.mxu0 0
  %847 = vmatmul.mubr.bf16.gmra.mrb[0].mxu0 %v624
  %v848 = vpop.f32.mrb[0].mxu0
  %v849 = vadd.f32 0.0, %v848
  %v850 = vpop.f32.mrb[0].mxu0
  %v851 = vpop.f32.mrb[0].mxu0
  %v852 = vadd.f32 0.0, %v851
  %v853 = vpop.f32.mrb[0].mxu0
  %854 = vdwg.mxu0
  %v879 = vunpack.c.l.b16 %v509
  %v880 = vunpack.c.h.b16 %v509
  %v881 = vunpack.c.l.b16 %v510
  %v882 = vunpack.c.h.b16 %v510
  %v883 = vunpack.c.l.b16 %v511
  %v884 = vunpack.c.h.b16 %v511
  %v885 = vunpack.c.l.b16 %v512
  %v886 = vunpack.c.h.b16 %v512
  %v887 = vunpack.c.l.b16 %v513
  %v888 = vunpack.c.h.b16 %v513
  %v889 = vunpack.c.l.b16 %v514
  %v890 = vunpack.c.h.b16 %v514
  %v891 = vunpack.c.l.b16 %v515
  %v892 = vunpack.c.h.b16 %v515
  %v893 = vunpack.c.l.b16 %v516
  %v894 = vunpack.c.h.b16 %v516
  %v895 = vunpack.c.l.b16 %v517
  %v896 = vunpack.c.h.b16 %v517
  %v897 = vunpack.c.l.b16 %v518
  %v898 = vunpack.c.h.b16 %v518
  %v899 = vunpack.c.l.b16 %v519
  %v900 = vunpack.c.h.b16 %v519
  %v901 = vunpack.c.l.b16 %v520
  %v902 = vunpack.c.h.b16 %v520
  %v903 = vunpack.c.l.b16 %v521
  %v904 = vunpack.c.h.b16 %v521
  %v905 = vunpack.c.l.b16 %v522
  %v906 = vunpack.c.h.b16 %v522
  %v907 = vunpack.c.l.b16 %v523
  %v908 = vunpack.c.h.b16 %v523
  %v909 = vunpack.c.l.b16 %v524
  %v910 = vunpack.c.h.b16 %v524
  %v911 = vunpack.c.l.b16 %v525
  %v912 = vunpack.c.h.b16 %v525
  %v913 = vunpack.c.l.b16 %v526
  %v914 = vunpack.c.h.b16 %v526
  %v915 = vunpack.c.l.b16 %v527
  %v916 = vunpack.c.h.b16 %v527
  %v917 = vunpack.c.l.b16 %v528
  %v918 = vunpack.c.h.b16 %v528
  %v919 = vunpack.c.l.b16 %v529
  %v920 = vunpack.c.h.b16 %v529
  %v921 = vunpack.c.l.b16 %v530
  %v922 = vunpack.c.h.b16 %v530
  %v923 = vunpack.c.l.b16 %v531
  %v924 = vunpack.c.h.b16 %v531
  %v925 = vunpack.c.l.b16 %v532
  %v926 = vunpack.c.h.b16 %v532
  %v927 = vpack.c.b16 %v879, %v879
  %v928 = vpack.c.b16 %v880, %v880
  %v929 = vpack.c.b16 %v881, %v881
  %v930 = vpack.c.b16 %v882, %v882
  %v931 = vpack.c.b16 %v883, %v883
  %v932 = vpack.c.b16 %v884, %v884
  %v933 = vpack.c.b16 %v885, %v885
  %v934 = vpack.c.b16 %v886, %v886
  %v935 = vpack.c.b16 %v887, %v887
  %v936 = vpack.c.b16 %v888, %v888
  %v937 = vpack.c.b16 %v889, %v889
  %v938 = vpack.c.b16 %v890, %v890
  %v939 = vpack.c.b16 %v891, %v891
  %v940 = vpack.c.b16 %v892, %v892
  %v941 = vpack.c.b16 %v893, %v893
  %v942 = vpack.c.b16 %v894, %v894
  %v943 = vpack.c.b16 %v895, %v895
  %v944 = vpack.c.b16 %v896, %v896
  %v945 = vpack.c.b16 %v897, %v897
  %v946 = vpack.c.b16 %v898, %v898
  %v947 = vpack.c.b16 %v899, %v899
  %v948 = vpack.c.b16 %v900, %v900
  %v949 = vpack.c.b16 %v901, %v901
  %v950 = vpack.c.b16 %v902, %v902
  %v951 = vpack.c.b16 %v903, %v903
  %v952 = vpack.c.b16 %v904, %v904
  %v953 = vpack.c.b16 %v905, %v905
  %v954 = vpack.c.b16 %v906, %v906
  %v955 = vpack.c.b16 %v907, %v907
  %v956 = vpack.c.b16 %v908, %v908
  %v957 = vpack.c.b16 %v909, %v909
  %v958 = vpack.c.b16 %v910, %v910
  %v959 = vpack.c.b16 %v911, %v911
  %v960 = vpack.c.b16 %v912, %v912
  %v961 = vpack.c.b16 %v913, %v913
  %v962 = vpack.c.b16 %v914, %v914
  %v963 = vpack.c.b16 %v915, %v915
  %v964 = vpack.c.b16 %v916, %v916
  %v965 = vpack.c.b16 %v917, %v917
  %v966 = vpack.c.b16 %v918, %v918
  %v967 = vpack.c.b16 %v919, %v919
  %v968 = vpack.c.b16 %v920, %v920
  %v969 = vpack.c.b16 %v921, %v921
  %v970 = vpack.c.b16 %v922, %v922
  %v971 = vpack.c.b16 %v923, %v923
  %v972 = vpack.c.b16 %v924, %v924
  %v973 = vpack.c.b16 %v925, %v925
  %v974 = vpack.c.b16 %v926, %v926
  %vm1023 = vcmask 289792
  %1024 = vst.msk [vmem:[%s4] sm:$0xf] %vm1023, %v927
  %1025 = vst.msk [vmem:[%s4 + $0x4] sm:$0xf] %vm1023, %v928
  %1026 = vst.msk [vmem:[%s4 + $0x8] sm:$0xf] %vm1023, %v929
  %1027 = vst.msk [vmem:[%s4 + $0xc] sm:$0xf] %vm1023, %v930
  %1028 = vst.msk [vmem:[%s4 + $0x10] sm:$0xf] %vm1023, %v931
  %1029 = vst.msk [vmem:[%s4 + $0x14] sm:$0xf] %vm1023, %v932
  %1030 = vst.msk [vmem:[%s4 + $0x18] sm:$0xf] %vm1023, %v933
  %1031 = vst.msk [vmem:[%s4 + $0x1c] sm:$0xf] %vm1023, %v934
  %1032 = vst.msk [vmem:[%s4 + $0x20] sm:$0xf] %vm1023, %v935
  %1033 = vst.msk [vmem:[%s4 + $0x24] sm:$0xf] %vm1023, %v936
  %1034 = vst.msk [vmem:[%s4 + $0x28] sm:$0xf] %vm1023, %v937
  %1035 = vst.msk [vmem:[%s4 + $0x2c] sm:$0xf] %vm1023, %v938
  %1036 = vst.msk [vmem:[%s4 + $0x30] sm:$0xf] %vm1023, %v939
  %1037 = vst.msk [vmem:[%s4 + $0x34] sm:$0xf] %vm1023, %v940
  %1038 = vst.msk [vmem:[%s4 + $0x38] sm:$0xf] %vm1023, %v941
  %1039 = vst.msk [vmem:[%s4 + $0x3c] sm:$0xf] %vm1023, %v942
  %1040 = vst.msk [vmem:[%s4 + $0x40] sm:$0xf] %vm1023, %v943
  %1041 = vst.msk [vmem:[%s4 + $0x44] sm:$0xf] %vm1023, %v944
  %1042 = vst.msk [vmem:[%s4 + $0x48] sm:$0xf] %vm1023, %v945
  %1043 = vst.msk [vmem:[%s4 + $0x4c] sm:$0xf] %vm1023, %v946
  %1044 = vst.msk [vmem:[%s4 + $0x50] sm:$0xf] %vm1023, %v947
  %1045 = vst.msk [vmem:[%s4 + $0x54] sm:$0xf] %vm1023, %v948
  %1046 = vst.msk [vmem:[%s4 + $0x58] sm:$0xf] %vm1023, %v949
  %1047 = vst.msk [vmem:[%s4 + $0x5c] sm:$0xf] %vm1023, %v950
  %1048 = vst.msk [vmem:[%s4 + $0x60] sm:$0xf] %vm1023, %v951
  %1049 = vst.msk [vmem:[%s4 + $0x64] sm:$0xf] %vm1023, %v952
  %1050 = vst.msk [vmem:[%s4 + $0x68] sm:$0xf] %vm1023, %v953
  %1051 = vst.msk [vmem:[%s4 + $0x6c] sm:$0xf] %vm1023, %v954
  %1052 = vst.msk [vmem:[%s4 + $0x70] sm:$0xf] %vm1023, %v955
  %1053 = vst.msk [vmem:[%s4 + $0x74] sm:$0xf] %vm1023, %v956
  %1054 = vst.msk [vmem:[%s4 + $0x78] sm:$0xf] %vm1023, %v957
  %1055 = vst.msk [vmem:[%s4 + $0x7c] sm:$0xf] %vm1023, %v958
  %1056 = vst.msk [vmem:[%s4 + $0x80] sm:$0xf] %vm1023, %v959
  %1057 = vst.msk [vmem:[%s4 + $0x84] sm:$0xf] %vm1023, %v960
  %1058 = vst.msk [vmem:[%s4 + $0x88] sm:$0xf] %vm1023, %v961
  %1059 = vst.msk [vmem:[%s4 + $0x8c] sm:$0xf] %vm1023, %v962
  %1060 = vst.msk [vmem:[%s4 + $0x90] sm:$0xf] %vm1023, %v963
  %1061 = vst.msk [vmem:[%s4 + $0x94] sm:$0xf] %vm1023, %v964
  %1062 = vst.msk [vmem:[%s4 + $0x98] sm:$0xf] %vm1023, %v965
  %1063 = vst.msk [vmem:[%s4 + $0x9c] sm:$0xf] %vm1023, %v966
  %1064 = vst.msk [vmem:[%s4 + $0xa0] sm:$0xf] %vm1023, %v967
  %1065 = vst.msk [vmem:[%s4 + $0xa4] sm:$0xf] %vm1023, %v968
  %1066 = vst.msk [vmem:[%s4 + $0xa8] sm:$0xf] %vm1023, %v969
  %1067 = vst.msk [vmem:[%s4 + $0xac] sm:$0xf] %vm1023, %v970
  %1068 = vst.msk [vmem:[%s4 + $0xb0] sm:$0xf] %vm1023, %v971
  %1069 = vst.msk [vmem:[%s4 + $0xb4] sm:$0xf] %vm1023, %v972
  %1070 = vst.msk [vmem:[%s4 + $0xb8] sm:$0xf] %vm1023, %v973
  %1071 = vst.msk [vmem:[%s4 + $0xbc] sm:$0xf] %vm1023, %v974
  %vm1072 = vcmask 64512
  %1073 = vst.msk [vmem:[%s5] sm:$0xff] %vm1072, %v665
  %1074 = vst.msk [vmem:[%s5 + $0x8] sm:$0xff] %vm1072, %v668
  %1075 = vst.msk [vmem:[%s5 + $0x10] sm:$0xff] %vm1072, %v673
  %1076 = vst.msk [vmem:[%s5 + $0x18] sm:$0xff] %vm1072, %v676
  %1077 = vst.msk [vmem:[%s5 + $0x20] sm:$0xff] %vm1072, %v681
  %1078 = vst.msk [vmem:[%s5 + $0x28] sm:$0xff] %vm1072, %v684
  %1079 = vst.msk [vmem:[%s5 + $0x30] sm:$0xff] %vm1072, %v689
  %1080 = vst.msk [vmem:[%s5 + $0x38] sm:$0xff] %vm1072, %v692
  %1081 = vst.msk [vmem:[%s5 + $0x40] sm:$0xff] %vm1072, %v697
  %1082 = vst.msk [vmem:[%s5 + $0x48] sm:$0xff] %vm1072, %v700
  %1083 = vst.msk [vmem:[%s5 + $0x50] sm:$0xff] %vm1072, %v705
  %1084 = vst.msk [vmem:[%s5 + $0x58] sm:$0xff] %vm1072, %v708
  %1085 = vst.msk [vmem:[%s5 + $0x60] sm:$0xff] %vm1072, %v713
  %1086 = vst.msk [vmem:[%s5 + $0x68] sm:$0xff] %vm1072, %v716
  %1087 = vst.msk [vmem:[%s5 + $0x70] sm:$0xff] %vm1072, %v721
  %1088 = vst.msk [vmem:[%s5 + $0x78] sm:$0xff] %vm1072, %v724
  %1089 = vst.msk [vmem:[%s5 + $0x80] sm:$0xff] %vm1072, %v729
  %1090 = vst.msk [vmem:[%s5 + $0x88] sm:$0xff] %vm1072, %v732
  %1091 = vst.msk [vmem:[%s5 + $0x90] sm:$0xff] %vm1072, %v737
  %1092 = vst.msk [vmem:[%s5 + $0x98] sm:$0xff] %vm1072, %v740
  %1093 = vst.msk [vmem:[%s5 + $0xa0] sm:$0xff] %vm1072, %v745
  %1094 = vst.msk [vmem:[%s5 + $0xa8] sm:$0xff] %vm1072, %v748
  %1095 = vst.msk [vmem:[%s5 + $0xb0] sm:$0xff] %vm1072, %v753
  %1096 = vst.msk [vmem:[%s5 + $0xb8] sm:$0xff] %vm1072, %v756
  %1097 = vst.msk [vmem:[%s5 + $0xc0] sm:$0xff] %vm1072, %v761
  %1098 = vst.msk [vmem:[%s5 + $0xc8] sm:$0xff] %vm1072, %v764
  %1099 = vst.msk [vmem:[%s5 + $0xd0] sm:$0xff] %vm1072, %v769
  %1100 = vst.msk [vmem:[%s5 + $0xd8] sm:$0xff] %vm1072, %v772
  %1101 = vst.msk [vmem:[%s5 + $0xe0] sm:$0xff] %vm1072, %v777
  %1102 = vst.msk [vmem:[%s5 + $0xe8] sm:$0xff] %vm1072, %v780
  %1103 = vst.msk [vmem:[%s5 + $0xf0] sm:$0xff] %vm1072, %v785
  %1104 = vst.msk [vmem:[%s5 + $0xf8] sm:$0xff] %vm1072, %v788
  %1105 = vst.msk [vmem:[%s5 + $0x100] sm:$0xff] %vm1072, %v793
  %1106 = vst.msk [vmem:[%s5 + $0x108] sm:$0xff] %vm1072, %v796
  %1107 = vst.msk [vmem:[%s5 + $0x110] sm:$0xff] %vm1072, %v801
  %1108 = vst.msk [vmem:[%s5 + $0x118] sm:$0xff] %vm1072, %v804
  %1109 = vst.msk [vmem:[%s5 + $0x120] sm:$0xff] %vm1072, %v809
  %1110 = vst.msk [vmem:[%s5 + $0x128] sm:$0xff] %vm1072, %v812
  %1111 = vst.msk [vmem:[%s5 + $0x130] sm:$0xff] %vm1072, %v817
  %1112 = vst.msk [vmem:[%s5 + $0x138] sm:$0xff] %vm1072, %v820
  %1113 = vst.msk [vmem:[%s5 + $0x140] sm:$0xff] %vm1072, %v825
  %1114 = vst.msk [vmem:[%s5 + $0x148] sm:$0xff] %vm1072, %v828
  %1115 = vst.msk [vmem:[%s5 + $0x150] sm:$0xff] %vm1072, %v833
  %1116 = vst.msk [vmem:[%s5 + $0x158] sm:$0xff] %vm1072, %v836
  %1117 = vst.msk [vmem:[%s5 + $0x160] sm:$0xff] %vm1072, %v841
  %1118 = vst.msk [vmem:[%s5 + $0x168] sm:$0xff] %vm1072, %v844
  %1119 = vst.msk [vmem:[%s5 + $0x170] sm:$0xff] %vm1072, %v849
  %1120 = vst.msk [vmem:[%s5 + $0x178] sm:$0xff] %vm1072, %v852
  // Predicated region
  $region18: #{tpu_custom_call.1} parent=0 // pred_check
    _
  $region19: #{tpu_custom_call.1} parent=0 // pred_check_branch
    %1122 = sbr.rel (0) target = $region21
  $region20: #{tpu_custom_call.1} parent=0 // pred_region
    _
  $region21: #{tpu_custom_call.1} parent=0 // pred_fallthru
    _
  // Predicated region
  $region22: #{tpu_custom_call.1} parent=0 // pred_check
    _
  $region23: #{tpu_custom_call.1} parent=0 // pred_check_branch
    %1124 = sbr.rel (0) target = $region25
  $region24: #{tpu_custom_call.1} parent=0 // pred_region
    _
  $region25: #{tpu_custom_call.1} parent=0 // pred_fallthru
    _
  // Predicated region
  $region26: #{tpu_custom_call.1} parent=0 // pred_check
    _
  $region27: #{tpu_custom_call.1} parent=0 // pred_check_branch
    %1126 = sbr.rel (0) target = $region29
  $region28: #{tpu_custom_call.1} parent=0 // pred_region
    _
  $region29: #{tpu_custom_call.1} parent=0 // pred_fallthru
    _
  // Predicated region
  $region30: #{tpu_custom_call.1} parent=0 // pred_check
    _
  $region31: #{tpu_custom_call.1} parent=0 // pred_check_branch
    %1128 = sbr.rel (0) target = $region33
  $region32: #{tpu_custom_call.1} parent=0 // pred_region
    _
  $region33: #{tpu_custom_call.1} parent=0 // pred_fallthru
    _

</llo_original>
